<compile_context>
chip_gen: v5e
topology: v5e:2x2
jax: 0.10.0
libtpu: 0.0.40
codegen_flags: <defaults>
</compile_context>

<pallas_src>
import functools

import jax
import jax.numpy as jnp
import numpy as np
from jax.experimental import pallas as pl
from jax.experimental.pallas import tpu as pltpu

EPS = 1e-5  # InstanceNorm2d default eps (affine=False, no running stats)


def _residual_block_kernel(x_ref, w1_ref, b1_ref, w2_ref, b2_ref, o_ref, *, H, W):
    # x_ref : (B*C, H*W)   lane-dense activations (flattened spatial on lanes,
    #                      (batch, channel) rows on sublanes)
    # w*_ref: (B*C, 9*B*C) batch-block-diagonal conv weights, tap-major
    # b*_ref: (B*C, 1)     conv bias per (batch, out-channel) row
    # o_ref : (B*C, H*W)
    BC, HW = x_ref.shape
    x = x_ref[...].astype(jnp.float32)

    # Lane-only boundary masks for ReflectionPad2d(1); broadcast over sublanes.
    lane = jax.lax.broadcasted_iota(jnp.int32, (1, HW), 1)
    col = lane % W          # W is a power of two here; for general W build a
                            # 2-D (H, W) iota instead of an integer modulo.
    first_col = col == 0
    last_col = col == W - 1
    first_row = lane < W
    last_row = lane >= (H - 1) * W

    def taps3x3(t):
        # The 9 reflect-padded shifted images, tap order (ky, kx) row-major.
        up_raw = pltpu.roll(t, shift=W, axis=1)          # t[idx - W]  (row h-1)
        down_raw = pltpu.roll(t, shift=HW - W, axis=1)   # t[idx + W]  (row h+1)
        up = jnp.where(first_row, down_raw, up_raw)      # reflect: h=0   -> h=1
        down = jnp.where(last_row, up_raw, down_raw)     # reflect: h=H-1 -> h=H-2
        taps = []
        for row in (up, t, down):                        # ky = 0, 1, 2
            left_raw = pltpu.roll(row, shift=1, axis=1)        # row[idx - 1]
            right_raw = pltpu.roll(row, shift=HW - 1, axis=1)  # row[idx + 1]
            left = jnp.where(first_col, right_raw, left_raw)   # w=0   -> w=1
            right = jnp.where(last_col, left_raw, right_raw)   # w=W-1 -> w=W-2
            taps.extend((left, row, right))                    # kx = 0, 1, 2
        return taps

    def conv3x3(t, w_ref, b_ref):
        # Stack the 9 shifted images along sublanes (9*BC rows, 8-aligned) and
        # run the whole conv as a single MXU matmul with f32 accumulation.
        stacked = jnp.concatenate(taps3x3(t), axis=0)          # (9*BC, HW)
        w = w_ref[...].astype(jnp.float32)                     # (BC, 9*BC)
        acc = jnp.dot(w, stacked, preferred_element_type=jnp.float32)
        return acc + b_ref[...].astype(jnp.float32)            # (BC,1) lane bcast

    def instance_norm(t):
        # Two-pass (centered) variance per (sample, channel) row over H*W lanes.
        inv_hw = 1.0 / HW
        mean = jnp.sum(t, axis=1, keepdims=True) * inv_hw
        c = t - mean
        var = jnp.sum(c * c, axis=1, keepdims=True) * inv_hw
        return c * jax.lax.rsqrt(var + EPS)

    h = conv3x3(x, w1_ref, b1_ref)
    h = instance_norm(h)
    h = jnp.maximum(h, 0.0)
    h = conv3x3(h, w2_ref, b2_ref)
    h = instance_norm(h)

    o_ref[...] = (x + h).astype(o_ref.dtype)


def _pack_weights(w_hwio, bias, B):
    """(3,3,Cin,Cout) HWIO + (Cout,) bias -> batch-block-diagonal (B*C, 9*B*C), (B*C, 1)."""
    C = w_hwio.shape[-1]
    w_taps = w_hwio.reshape(9, C, C)              # [t, ci, co], t = ky*3 + kx
    w_perm = jnp.transpose(w_taps, (0, 2, 1))     # [t, co, ci]
    eye = jnp.eye(B, dtype=w_hwio.dtype)
    # bd[t, b, co, b', ci] = eye[b, b'] * w[t, co, ci]  (per-image block diag)
    bd = eye[None, :, None, :, None] * w_perm[:, None, :, None, :]
    w_big = jnp.transpose(bd, (1, 2, 0, 3, 4)).reshape(B * C, 9 * B * C)
    b_big = jnp.tile(bias, B).reshape(B * C, 1)
    return w_big, b_big


def residual_block(x_nchw, w1_hwio, b1, w2_hwio, b2):
    """x_nchw: (B, C, H, W); w*_hwio: (3, 3, Cin, Cout); b*: (Cout,)."""
    B, C, H, W = x_nchw.shape
    HW = H * W
    BC = B * C
    x_flat = x_nchw.reshape(BC, HW)      # dense (B*C, H*W): all sublanes used

    w1_big, b1_big = _pack_weights(w1_hwio, b1, B)
    w2_big, b2_big = _pack_weights(w2_hwio, b2, B)

    kernel = functools.partial(_residual_block_kernel, H=H, W=W)

    # Single whole-problem block (no grid): everything fits comfortably in
    # VMEM at these sizes; see TODO(synk) above for the large-image tiling.
    out_flat = pl.pallas_call(
        kernel,
        out_shape=jax.ShapeDtypeStruct((BC, HW), x_nchw.dtype),
    )(x_flat, w1_big, b1_big, w2_big, b2_big)
    return out_flat.reshape(B, C, H, W)


def residual_block_ref(x_nchw, w1_hwio, b1, w2_hwio, b2):
    # Pure-JAX reference (NHWC lax.conv) for correctness checking.
    x = jnp.transpose(x_nchw, (0, 2, 3, 1))

    def conv(t, w, b):
        tp = jnp.pad(t, ((0, 0), (1, 1), (1, 1), (0, 0)), mode="reflect")
        y = jax.lax.conv_general_dilated(
            tp, w, window_strides=(1, 1), padding="VALID",
            dimension_numbers=("NHWC", "HWIO", "NHWC"),
            precision=jax.lax.Precision.HIGHEST)
        return y + b.reshape(1, 1, 1, -1)

    def inorm(t):
        m = jnp.mean(t, axis=(1, 2), keepdims=True)
        v = jnp.mean((t - m) ** 2, axis=(1, 2), keepdims=True)
        return (t - m) * jax.lax.rsqrt(v + EPS)

    h = conv(x, w1_hwio, b1)
    h = inorm(h)
    h = jnp.maximum(h, 0.0)
    h = conv(h, w2_hwio, b2)
    h = inorm(h)
    return jnp.transpose(x + h, (0, 3, 1, 2))


if __name__ == "__main__":
    B, C, H, W = 2, 4, 16, 16
    key = jax.random.PRNGKey(0)
    k1, k2, k3, k4, k5 = jax.random.split(key, 5)

    # Deterministic synthetic parameters (Conv2d(C, C, kernel_size=3) x 2).
    x = jax.random.normal(k1, (B, C, H, W), jnp.float32)          # NCHW like PyTorch
    w1 = jax.random.normal(k2, (3, 3, C, C), jnp.float32) * 0.1   # HWIO
    b1 = jax.random.normal(k3, (C,), jnp.float32) * 0.1
    w2 = jax.random.normal(k4, (3, 3, C, C), jnp.float32) * 0.1
    b2 = jax.random.normal(k5, (C,), jnp.float32) * 0.1

    out = residual_block(x, w1, b1, w2, b2)
    jax.block_until_ready(out)

    ref = residual_block_ref(x, w1, b1, w2, b2)
    # Tolerance covers MXU f32 multi-pass matmul vs HIGHEST-precision conv
    # reference; InstanceNorm now uses a centered two-pass variance.
    np.testing.assert_allclose(np.asarray(out), np.asarray(ref),
                               atol=2e-3, rtol=2e-3)
    print("KERNEL_OK")
</pallas_src>

<mosaic_0001>
module attributes {stable_mosaic.version = 11 : i64} {
  func.func @_residual_block_kernel(%arg0: memref<8x256xf32, #tpu.memory_space<vmem>>, %arg1: memref<8x72xf32, #tpu.memory_space<vmem>>, %arg2: memref<8x1xf32, #tpu.memory_space<vmem>>, %arg3: memref<8x72xf32, #tpu.memory_space<vmem>>, %arg4: memref<8x1xf32, #tpu.memory_space<vmem>>, %arg5: memref<8x256xf32, #tpu.memory_space<vmem>>) attributes {dimension_semantics = [], scalar_prefetch = 0 : i64, scratch_operands = 0 : i64, tpu.core_type = #tpu.core_type<tc>} {
    %c0 = arith.constant 0 : index
    %c0_0 = arith.constant 0 : index
    %0 = vector.load %arg0[%c0, %c0_0] : memref<8x256xf32, #tpu.memory_space<vmem>>, vector<8x256xf32>
    %1 = tpu.iota {dimensions = array<i32: 1>} : vector<1x256xi32>
    %c16_i32 = arith.constant 16 : i32
    %c0_i32 = arith.constant 0 : i32
    %2 = arith.cmpi eq, %c16_i32, %c0_i32 : i32
    %c1_i32 = arith.constant 1 : i32
    %3 = arith.select %2, %c1_i32, %c16_i32 : i32
    %4 = vector.broadcast %3 : i32 to vector<1x256xi32>
    %5 = arith.remsi %1, %4 : vector<1x256xi32>
    %c0_i32_1 = arith.constant 0 : i32
    %6 = vector.broadcast %c0_i32_1 : i32 to vector<1x256xi32>
    %7 = arith.cmpi ne, %5, %6 : vector<1x256xi32>
    %c0_i32_2 = arith.constant 0 : i32
    %8 = vector.broadcast %c0_i32_2 : i32 to vector<1x256xi32>
    %9 = arith.cmpi slt, %5, %8 : vector<1x256xi32>
    %c0_i32_3 = arith.constant 0 : i32
    %10 = arith.cmpi slt, %3, %c0_i32_3 : i32
    %11 = vector.broadcast %10 : i1 to vector<1x256xi1>
    %12 = vector.broadcast %11 : vector<1x256xi1> to vector<1x256xi1>
    %13 = arith.xori %9, %12 : vector<1x256xi1>
    %14 = arith.andi %13, %7 : vector<1x256xi1>
    %15 = vector.broadcast %3 : i32 to vector<1x256xi32>
    %16 = arith.addi %5, %15 : vector<1x256xi32>
    %17 = arith.select %14, %16, %5 : vector<1x256xi1>, vector<1x256xi32>
    %c0_i32_4 = arith.constant 0 : i32
    %18 = vector.broadcast %c0_i32_4 : i32 to vector<1x256xi32>
    %19 = arith.cmpi eq, %17, %18 : vector<1x256xi32>
    %c15_i32 = arith.constant 15 : i32
    %20 = vector.broadcast %c15_i32 : i32 to vector<1x256xi32>
    %21 = arith.cmpi eq, %17, %20 : vector<1x256xi32>
    %c16_i32_5 = arith.constant 16 : i32
    %22 = vector.broadcast %c16_i32_5 : i32 to vector<1x256xi32>
    %23 = arith.cmpi slt, %1, %22 : vector<1x256xi32>
    %c240_i32 = arith.constant 240 : i32
    %24 = vector.broadcast %c240_i32 : i32 to vector<1x256xi32>
    %25 = arith.cmpi sge, %1, %24 : vector<1x256xi32>
    %c16_i32_6 = arith.constant 16 : i32
    %26 = tpu.dynamic_rotate %0 by %c16_i32_6 dim 1 : vector<8x256xf32>, i32 -> vector<8x256xf32>
    %c240_i32_7 = arith.constant 240 : i32
    %27 = tpu.dynamic_rotate %0 by %c240_i32_7 dim 1 : vector<8x256xf32>, i32 -> vector<8x256xf32>
    %28 = vector.shape_cast %23 : vector<1x256xi1> to vector<1x256xi1>
    %29 = vector.broadcast %28 : vector<1x256xi1> to vector<8x256xi1>
    %30 = arith.select %29, %27, %26 : vector<8x256xi1>, vector<8x256xf32>
    %31 = vector.shape_cast %25 : vector<1x256xi1> to vector<1x256xi1>
    %32 = vector.broadcast %31 : vector<1x256xi1> to vector<8x256xi1>
    %33 = arith.select %32, %26, %27 : vector<8x256xi1>, vector<8x256xf32>
    %c1_i32_8 = arith.constant 1 : i32
    %34 = tpu.dynamic_rotate %30 by %c1_i32_8 dim 1 : vector<8x256xf32>, i32 -> vector<8x256xf32>
    %c255_i32 = arith.constant 255 : i32
    %35 = tpu.dynamic_rotate %30 by %c255_i32 dim 1 : vector<8x256xf32>, i32 -> vector<8x256xf32>
    %36 = vector.shape_cast %19 : vector<1x256xi1> to vector<1x256xi1>
    %37 = vector.broadcast %36 : vector<1x256xi1> to vector<8x256xi1>
    %38 = arith.select %37, %35, %34 : vector<8x256xi1>, vector<8x256xf32>
    %39 = vector.shape_cast %21 : vector<1x256xi1> to vector<1x256xi1>
    %40 = vector.broadcast %39 : vector<1x256xi1> to vector<8x256xi1>
    %41 = arith.select %40, %34, %35 : vector<8x256xi1>, vector<8x256xf32>
    %c1_i32_9 = arith.constant 1 : i32
    %42 = tpu.dynamic_rotate %0 by %c1_i32_9 dim 1 : vector<8x256xf32>, i32 -> vector<8x256xf32>
    %c255_i32_10 = arith.constant 255 : i32
    %43 = tpu.dynamic_rotate %0 by %c255_i32_10 dim 1 : vector<8x256xf32>, i32 -> vector<8x256xf32>
    %44 = vector.shape_cast %19 : vector<1x256xi1> to vector<1x256xi1>
    %45 = vector.broadcast %44 : vector<1x256xi1> to vector<8x256xi1>
    %46 = arith.select %45, %43, %42 : vector<8x256xi1>, vector<8x256xf32>
    %47 = vector.shape_cast %21 : vector<1x256xi1> to vector<1x256xi1>
    %48 = vector.broadcast %47 : vector<1x256xi1> to vector<8x256xi1>
    %49 = arith.select %48, %42, %43 : vector<8x256xi1>, vector<8x256xf32>
    %c1_i32_11 = arith.constant 1 : i32
    %50 = tpu.dynamic_rotate %33 by %c1_i32_11 dim 1 : vector<8x256xf32>, i32 -> vector<8x256xf32>
    %c255_i32_12 = arith.constant 255 : i32
    %51 = tpu.dynamic_rotate %33 by %c255_i32_12 dim 1 : vector<8x256xf32>, i32 -> vector<8x256xf32>
    %52 = vector.shape_cast %19 : vector<1x256xi1> to vector<1x256xi1>
    %53 = vector.broadcast %52 : vector<1x256xi1> to vector<8x256xi1>
    %54 = arith.select %53, %51, %50 : vector<8x256xi1>, vector<8x256xf32>
    %55 = vector.shape_cast %21 : vector<1x256xi1> to vector<1x256xi1>
    %56 = vector.broadcast %55 : vector<1x256xi1> to vector<8x256xi1>
    %57 = arith.select %56, %50, %51 : vector<8x256xi1>, vector<8x256xf32>
    %58 = tpu.concatenate %38, %30, %41, %46, %0, %49, %54, %33, %57 in 0 : vector<8x256xf32>, vector<8x256xf32>, vector<8x256xf32>, vector<8x256xf32>, vector<8x256xf32>, vector<8x256xf32>, vector<8x256xf32>, vector<8x256xf32>, vector<8x256xf32> -> vector<72x256xf32>
    %c0_13 = arith.constant 0 : index
    %c0_14 = arith.constant 0 : index
    %59 = vector.load %arg1[%c0_13, %c0_14] : memref<8x72xf32, #tpu.memory_space<vmem>>, vector<8x72xf32>
    %cst = arith.constant dense<0.000000e+00> : vector<8x256xf32>
    %60 = tpu.matmul %59, %58, %cst {dimension_numbers = #tpu.dot_dimension_numbers<[1], [0], [0], [1], [0, 0, 1, 1], [], []>} : vector<8x72xf32>, vector<72x256xf32>, vector<8x256xf32> -> vector<8x256xf32>
    %c0_15 = arith.constant 0 : index
    %c0_16 = arith.constant 0 : index
    %61 = vector.load %arg2[%c0_15, %c0_16] : memref<8x1xf32, #tpu.memory_space<vmem>>, vector<8x1xf32>
    %62 = vector.broadcast %61 : vector<8x1xf32> to vector<8x256xf32>
    %63 = arith.addf %60, %62 : vector<8x256xf32>
    %cst_17 = arith.constant dense<0.000000e+00> : vector<8xf32>
    %64 = vector.multi_reduction <add>, %63, %cst_17 [1] : vector<8x256xf32> to vector<8xf32>
    %65 = vector.shape_cast %64 : vector<8xf32> to vector<8x1xf32>
    %cst_18 = arith.constant 3.906250e-03 : f32
    %66 = vector.broadcast %cst_18 : f32 to vector<8x1xf32>
    %67 = arith.mulf %65, %66 : vector<8x1xf32>
    %68 = vector.broadcast %67 : vector<8x1xf32> to vector<8x256xf32>
    %69 = arith.subf %63, %68 : vector<8x256xf32>
    %70 = arith.mulf %69, %69 : vector<8x256xf32>
    %cst_19 = arith.constant dense<0.000000e+00> : vector<8xf32>
    %71 = vector.multi_reduction <add>, %70, %cst_19 [1] : vector<8x256xf32> to vector<8xf32>
    %72 = vector.shape_cast %71 : vector<8xf32> to vector<8x1xf32>
    %cst_20 = arith.constant 3.906250e-03 : f32
    %73 = vector.broadcast %cst_20 : f32 to vector<8x1xf32>
    %74 = arith.mulf %72, %73 : vector<8x1xf32>
    %cst_21 = arith.constant 9.99999974E-6 : f32
    %75 = vector.broadcast %cst_21 : f32 to vector<8x1xf32>
    %76 = arith.addf %74, %75 : vector<8x1xf32>
    %77 = math.rsqrt %76 : vector<8x1xf32>
    %78 = vector.broadcast %77 : vector<8x1xf32> to vector<8x256xf32>
    %79 = arith.mulf %69, %78 : vector<8x256xf32>
    %cst_22 = arith.constant 0.000000e+00 : f32
    %80 = vector.broadcast %cst_22 : f32 to vector<8x256xf32>
    %81 = arith.maximumf %79, %80 : vector<8x256xf32>
    %c16_i32_23 = arith.constant 16 : i32
    %82 = tpu.dynamic_rotate %81 by %c16_i32_23 dim 1 : vector<8x256xf32>, i32 -> vector<8x256xf32>
    %c240_i32_24 = arith.constant 240 : i32
    %83 = tpu.dynamic_rotate %81 by %c240_i32_24 dim 1 : vector<8x256xf32>, i32 -> vector<8x256xf32>
    %84 = vector.shape_cast %23 : vector<1x256xi1> to vector<1x256xi1>
    %85 = vector.broadcast %84 : vector<1x256xi1> to vector<8x256xi1>
    %86 = arith.select %85, %83, %82 : vector<8x256xi1>, vector<8x256xf32>
    %87 = vector.shape_cast %25 : vector<1x256xi1> to vector<1x256xi1>
    %88 = vector.broadcast %87 : vector<1x256xi1> to vector<8x256xi1>
    %89 = arith.select %88, %82, %83 : vector<8x256xi1>, vector<8x256xf32>
    %c1_i32_25 = arith.constant 1 : i32
    %90 = tpu.dynamic_rotate %86 by %c1_i32_25 dim 1 : vector<8x256xf32>, i32 -> vector<8x256xf32>
    %c255_i32_26 = arith.constant 255 : i32
    %91 = tpu.dynamic_rotate %86 by %c255_i32_26 dim 1 : vector<8x256xf32>, i32 -> vector<8x256xf32>
    %92 = vector.shape_cast %19 : vector<1x256xi1> to vector<1x256xi1>
    %93 = vector.broadcast %92 : vector<1x256xi1> to vector<8x256xi1>
    %94 = arith.select %93, %91, %90 : vector<8x256xi1>, vector<8x256xf32>
    %95 = vector.shape_cast %21 : vector<1x256xi1> to vector<1x256xi1>
    %96 = vector.broadcast %95 : vector<1x256xi1> to vector<8x256xi1>
    %97 = arith.select %96, %90, %91 : vector<8x256xi1>, vector<8x256xf32>
    %c1_i32_27 = arith.constant 1 : i32
    %98 = tpu.dynamic_rotate %81 by %c1_i32_27 dim 1 : vector<8x256xf32>, i32 -> vector<8x256xf32>
    %c255_i32_28 = arith.constant 255 : i32
    %99 = tpu.dynamic_rotate %81 by %c255_i32_28 dim 1 : vector<8x256xf32>, i32 -> vector<8x256xf32>
    %100 = vector.shape_cast %19 : vector<1x256xi1> to vector<1x256xi1>
    %101 = vector.broadcast %100 : vector<1x256xi1> to vector<8x256xi1>
    %102 = arith.select %101, %99, %98 : vector<8x256xi1>, vector<8x256xf32>
    %103 = vector.shape_cast %21 : vector<1x256xi1> to vector<1x256xi1>
    %104 = vector.broadcast %103 : vector<1x256xi1> to vector<8x256xi1>
    %105 = arith.select %104, %98, %99 : vector<8x256xi1>, vector<8x256xf32>
    %c1_i32_29 = arith.constant 1 : i32
    %106 = tpu.dynamic_rotate %89 by %c1_i32_29 dim 1 : vector<8x256xf32>, i32 -> vector<8x256xf32>
    %c255_i32_30 = arith.constant 255 : i32
    %107 = tpu.dynamic_rotate %89 by %c255_i32_30 dim 1 : vector<8x256xf32>, i32 -> vector<8x256xf32>
    %108 = vector.shape_cast %19 : vector<1x256xi1> to vector<1x256xi1>
    %109 = vector.broadcast %108 : vector<1x256xi1> to vector<8x256xi1>
    %110 = arith.select %109, %107, %106 : vector<8x256xi1>, vector<8x256xf32>
    %111 = vector.shape_cast %21 : vector<1x256xi1> to vector<1x256xi1>
    %112 = vector.broadcast %111 : vector<1x256xi1> to vector<8x256xi1>
    %113 = arith.select %112, %106, %107 : vector<8x256xi1>, vector<8x256xf32>
    %114 = tpu.concatenate %94, %86, %97, %102, %81, %105, %110, %89, %113 in 0 : vector<8x256xf32>, vector<8x256xf32>, vector<8x256xf32>, vector<8x256xf32>, vector<8x256xf32>, vector<8x256xf32>, vector<8x256xf32>, vector<8x256xf32>, vector<8x256xf32> -> vector<72x256xf32>
    %c0_31 = arith.constant 0 : index
    %c0_32 = arith.constant 0 : index
    %115 = vector.load %arg3[%c0_31, %c0_32] : memref<8x72xf32, #tpu.memory_space<vmem>>, vector<8x72xf32>
    %cst_33 = arith.constant dense<0.000000e+00> : vector<8x256xf32>
    %116 = tpu.matmul %115, %114, %cst_33 {dimension_numbers = #tpu.dot_dimension_numbers<[1], [0], [0], [1], [0, 0, 1, 1], [], []>} : vector<8x72xf32>, vector<72x256xf32>, vector<8x256xf32> -> vector<8x256xf32>
    %c0_34 = arith.constant 0 : index
    %c0_35 = arith.constant 0 : index
    %117 = vector.load %arg4[%c0_34, %c0_35] : memref<8x1xf32, #tpu.memory_space<vmem>>, vector<8x1xf32>
    %118 = vector.broadcast %117 : vector<8x1xf32> to vector<8x256xf32>
    %119 = arith.addf %116, %118 : vector<8x256xf32>
    %cst_36 = arith.constant dense<0.000000e+00> : vector<8xf32>
    %120 = vector.multi_reduction <add>, %119, %cst_36 [1] : vector<8x256xf32> to vector<8xf32>
    %121 = vector.shape_cast %120 : vector<8xf32> to vector<8x1xf32>
    %cst_37 = arith.constant 3.906250e-03 : f32
    %122 = vector.broadcast %cst_37 : f32 to vector<8x1xf32>
    %123 = arith.mulf %121, %122 : vector<8x1xf32>
    %124 = vector.broadcast %123 : vector<8x1xf32> to vector<8x256xf32>
    %125 = arith.subf %119, %124 : vector<8x256xf32>
    %126 = arith.mulf %125, %125 : vector<8x256xf32>
    %cst_38 = arith.constant dense<0.000000e+00> : vector<8xf32>
    %127 = vector.multi_reduction <add>, %126, %cst_38 [1] : vector<8x256xf32> to vector<8xf32>
    %128 = vector.shape_cast %127 : vector<8xf32> to vector<8x1xf32>
    %cst_39 = arith.constant 3.906250e-03 : f32
    %129 = vector.broadcast %cst_39 : f32 to vector<8x1xf32>
    %130 = arith.mulf %128, %129 : vector<8x1xf32>
    %cst_40 = arith.constant 9.99999974E-6 : f32
    %131 = vector.broadcast %cst_40 : f32 to vector<8x1xf32>
    %132 = arith.addf %130, %131 : vector<8x1xf32>
    %133 = math.rsqrt %132 : vector<8x1xf32>
    %134 = vector.broadcast %133 : vector<8x1xf32> to vector<8x256xf32>
    %135 = arith.mulf %125, %134 : vector<8x256xf32>
    %136 = arith.addf %0, %135 : vector<8x256xf32>
    %c0_41 = arith.constant 0 : index
    %c0_42 = arith.constant 0 : index
    %137 = vector.load %arg5[%c0_41, %c0_42] : memref<8x256xf32, #tpu.memory_space<vmem>>, vector<8x256xf32>
    tpu.vector_store %arg5[%c0_41, %c0_42], %136 {strides = array<i32>} : memref<8x256xf32, #tpu.memory_space<vmem>>, vector<8x256xf32>,
    return
  }
}

</mosaic_0001>

<llo_original>
// kernel: tpu_custom_call.1
$region0: #{tpu_custom_call.1}
  #allocation0 [shape = 'u32[]', space=smem, size = 0x4, offset = 0x4, fixed_abs, tag = 'smem constant byte address 0x4 - core index']
  #allocation1 [shape = 'u32[72,128]{1,0:T(1,128)}', space=vmem, size = 0x9000, scoped, tag = 'internal scratch']
  %s0 = inlined_call_operand.vmem [shape: f32[8,256], index: 0, kind: input, shape index: {}]
  %s1 = inlined_call_operand.hbm [shape: f32[8,72], index: 1, kind: input, shape index: {}]
  %s2 = inlined_call_operand.vmem [shape: f32[8,1], index: 2, kind: input, shape index: {}]
  %s3 = inlined_call_operand.hbm [shape: f32[8,72], index: 3, kind: input, shape index: {}]
  %s4 = inlined_call_operand.vmem [shape: f32[8,1], index: 4, kind: input, shape index: {}]
  %s5 = inlined_call_operand.hbm [shape: f32[8,256], index: 5, kind: output, shape index: {}]
  %s6 = sld [smem:[#allocation0]]
  $region38: #{tpu_custom_call.1} parent=0
    _
  %s8 = ssub.s32 1, %s6
  %s9 = scalar_select 0, %s8, %s6
  $region1: #{tpu_custom_call.1} parent=0
    #allocation2 [shape = 'u8[4096]{0}', space=vmem, size = 0x1000, scoped, tag = 'input window, operand 1, single buffered']
    #allocation3 [shape = 's32[1]{0}', space=sflag, size = 0x4, scoped, tag = 'scoped memory for tpu_custom_call.1']
    #allocation4 [shape = 's32[1]{0}', space=sflag, size = 0x4, scoped, tag = 'scoped memory for tpu_custom_call.1']
    #allocation5 [shape = 'u8[4096]{0}', space=vmem, size = 0x1000, scoped, tag = 'input window, operand 3, single buffered']
    #allocation6 [shape = 's32[1]{0}', space=sflag, size = 0x4, scoped, tag = 'scoped memory for tpu_custom_call.1']
    #allocation7 [shape = 'u8[8192]{0}', space=vmem, size = 0x2000, scoped, tag = 'output window, operand 0, single buffered']
    %10 = vsyncpa [#allocation3], 0
    %11 = vsyncpa [#allocation6], 0
    %12 = vsyncpa [#allocation4], 0
    // Predicated region
    $region2: #{tpu_custom_call.1} parent=1 // pred_check
      _
    $region3: #{tpu_custom_call.1} parent=1 // pred_check_branch
      %14 = sbr.rel (0) target = $region5
    $region4: #{tpu_custom_call.1} parent=1 // pred_region
      _
    $region5: #{tpu_custom_call.1} parent=1 // pred_fallthru
      _
    // Predicated region
    $region6: #{tpu_custom_call.1} parent=1 // pred_check
      _
    $region7: #{tpu_custom_call.1} parent=1 // pred_check_branch
      %16 = sbr.rel (0) target = $region9
    $region8: #{tpu_custom_call.1} parent=1 // pred_region
      %18 = vsyncadd [#allocation3], 0
      %s20 = sshll.u32 %s1, 4
      %s21 = int_to_ptr.hbm [resolvable:$true] %s20
      %s22 = sshll.u32 [#allocation2], 4
      %s23 = int_to_ptr.vmem [resolvable:$true] %s22
      %25 = dma.hbm_to_vmem [thread:$0]  %s21, 128, %s23, [#allocation3]
    $region9: #{tpu_custom_call.1} parent=1 // pred_fallthru
      _
    // Predicated region
    $region10: #{tpu_custom_call.1} parent=1 // pred_check
      _
    $region11: #{tpu_custom_call.1} parent=1 // pred_check_branch
      %27 = sbr.rel (0) target = $region13
    $region12: #{tpu_custom_call.1} parent=1 // pred_region
      _
    $region13: #{tpu_custom_call.1} parent=1 // pred_fallthru
      _
    // Predicated region
    $region14: #{tpu_custom_call.1} parent=1 // pred_check
      _
    $region15: #{tpu_custom_call.1} parent=1 // pred_check_branch
      %29 = sbr.rel (0) target = $region17
    $region16: #{tpu_custom_call.1} parent=1 // pred_region
      %31 = vsyncadd [#allocation6], 0
      %s33 = sshll.u32 %s3, 4
      %s34 = int_to_ptr.hbm [resolvable:$true] %s33
      %s35 = sshll.u32 [#allocation5], 4
      %s36 = int_to_ptr.vmem [resolvable:$true] %s35
      %38 = dma.hbm_to_vmem [thread:$0]  %s34, 128, %s36, [#allocation6]
    $region17: #{tpu_custom_call.1} parent=1 // pred_fallthru
      _
    // Predicated region
    $region18: #{tpu_custom_call.1} parent=1 // pred_check
      _
    $region19: #{tpu_custom_call.1} parent=1 // pred_check_branch
      %40 = sbr.rel (0) target = $region21
    $region20: #{tpu_custom_call.1} parent=1 // pred_region
      _
    $region21: #{tpu_custom_call.1} parent=1 // pred_fallthru
      _
    // Predicated region
    $region22: #{tpu_custom_call.1} parent=1 // pred_check
      _
    $region23: #{tpu_custom_call.1} parent=1 // pred_check_branch
      %42 = sbr.rel (0) target = $region25
    $region24: #{tpu_custom_call.1} parent=1 // pred_region
      %44 = dma.done [#allocation3], 128
    $region25: #{tpu_custom_call.1} parent=1 // pred_fallthru
      _
    // Predicated region
    $region26: #{tpu_custom_call.1} parent=1 // pred_check
      _
    $region27: #{tpu_custom_call.1} parent=1 // pred_check_branch
      %46 = sbr.rel (0) target = $region29
    $region28: #{tpu_custom_call.1} parent=1 // pred_region
      %48 = dma.done [#allocation6], 128
    $region29: #{tpu_custom_call.1} parent=1 // pred_fallthru
      _
    %v49 = vld [vmem:[%s0] sm:$0xff]
    %v50 = vld [vmem:[%s0 + $0x8] sm:$0xff]
    %v51 = vlaneseq
    %v52 = vand.u32 %v51, 127
    %v53 = vadd.s32 %v52, 128
    %vm54 = vcmp.lt.s32.totalorder %v52, 0
    %v55 = vsub.s32 0, %v52
    %v56 = vsel %vm54, %v55, %v52
    %v57 = vshrl.u32 %v56, 4
    %v58 = vand.u32 %v56, 15
    %v59 = vsub.s32 0, %v58
    %v60 = vsel %vm54, %v59, %v58
    %vm61 = vcmp.lt.s32.totalorder %v53, 0
    %v62 = vsub.s32 0, %v53
    %v63 = vsel %vm61, %v62, %v53
    %v64 = vshrl.u32 %v63, 4
    %v65 = vand.u32 %v63, 15
    %v66 = vsub.s32 0, %v65
    %v67 = vsel %vm61, %v66, %v65
    %vm68 = vcmp.ne.s32.totalorder %v60, 0
    %vm69 = vcmp.ne.s32.totalorder %v67, 0
    %vm70 = vcmp.lt.s32.totalorder %v60, 0
    %vm71 = vcmp.lt.s32.totalorder %v67, 0
    %vm72 = vmand %vm70, %vm68
    %vm73 = vmand %vm71, %vm69
    %v74 = vadd.s32 %v60, 16
    %v75 = vadd.s32 %v67, 16
    %v76 = vsel %vm72, %v74, %v60
    %v77 = vsel %vm73, %v75, %v67
    %vm78 = vcmp.eq.s32.totalorder %v76, 0
    %vm79 = vcmp.eq.s32.totalorder %v77, 0
    %vm80 = vcmp.eq.s32.totalorder %v76, 15
    %vm81 = vcmp.eq.s32.totalorder %v77, 15
    %vm82 = vcmp.lt.s32.totalorder %v52, 16
    %vm83 = vcmp.lt.s32.totalorder %v53, 16
    %vm84 = vcmp.ge.s32.totalorder %v52, 240
    %vm85 = vcmp.ge.s32.totalorder %v53, 240
    %86 = vrot.lane.b32.xlu0 %v49, 16
    %v87 = vpop.permute.xlu0 %86
    %88 = vrot.lane.b32.xlu0 %v50, 16
    %v89 = vpop.permute.xlu0 %88
    %v90 = vsel %vm82, %v87, %v89
    %v91 = vsel %vm82, %v89, %v87
    %92 = vrot.lane.b32.xlu0 %v49, 112
    %v93 = vpop.permute.xlu0 %92
    %94 = vrot.lane.b32.xlu0 %v50, 112
    %v95 = vpop.permute.xlu0 %94
    %vm96 = vcmp.lt.s32.totalorder %v52, 112
    %v97 = vsel %vm96, %v93, %v95
    %v98 = vsel %vm96, %v95, %v93
    %v99 = vsel %vm82, 1, 0
    %v100 = vsel %vm83, 1, 0
    %vm101 = vcmp.eq.s32.totalorder %v99, 1
    %vm102 = vcmp.eq.s32.totalorder %v100, 1
    %v103 = vsel %vm101, %v97, %v91
    %v104 = vsel %vm102, %v98, %v90
    %v105 = vsel %vm84, 1, 0
    %v106 = vsel %vm85, 1, 0
    %vm107 = vcmp.eq.s32.totalorder %v105, 1
    %vm108 = vcmp.eq.s32.totalorder %v106, 1
    %v109 = vsel %vm107, %v91, %v97
    %v110 = vsel %vm108, %v90, %v98
    %111 = vrot.lane.b32.xlu0 %v103, 1
    %v112 = vpop.permute.xlu0 %111
    %113 = vrot.lane.b32.xlu0 %v104, 1
    %v114 = vpop.permute.xlu0 %113
    %vm115 = vcmp.lt.s32.totalorder %v52, 1
    %v116 = vsel %vm115, %v112, %v114
    %v117 = vsel %vm115, %v114, %v112
    %118 = vrot.lane.b32.xlu0 %v103, 127
    %v119 = vpop.permute.xlu0 %118
    %120 = vrot.lane.b32.xlu0 %v104, 127
    %v121 = vpop.permute.xlu0 %120
    %vm122 = vcmp.lt.s32.totalorder %v52, 127
    %v123 = vsel %vm122, %v119, %v121
    %v124 = vsel %vm122, %v121, %v119
    %v125 = vsel %vm78, 1, 0
    %v126 = vsel %vm79, 1, 0
    %vm127 = vcmp.eq.s32.totalorder %v125, 1
    %vm128 = vcmp.eq.s32.totalorder %v126, 1
    %v129 = vsel %vm127, %v123, %v117
    %v130 = vsel %vm128, %v124, %v116
    %v131 = vsel %vm80, 1, 0
    %v132 = vsel %vm81, 1, 0
    %vm133 = vcmp.eq.s32.totalorder %v131, 1
    %vm134 = vcmp.eq.s32.totalorder %v132, 1
    %v135 = vsel %vm133, %v117, %v123
    %v136 = vsel %vm134, %v116, %v124
    %137 = vrot.lane.b32.xlu0 %v49, 1
    %v138 = vpop.permute.xlu0 %137
    %139 = vrot.lane.b32.xlu0 %v50, 1
    %v140 = vpop.permute.xlu0 %139
    %v141 = vsel %vm115, %v138, %v140
    %v142 = vsel %vm115, %v140, %v138
    %143 = vrot.lane.b32.xlu0 %v49, 127
    %v144 = vpop.permute.xlu0 %143
    %145 = vrot.lane.b32.xlu0 %v50, 127
    %v146 = vpop.permute.xlu0 %145
    %v147 = vsel %vm122, %v144, %v146
    %v148 = vsel %vm122, %v146, %v144
    %v149 = vsel %vm127, %v147, %v142
    %v150 = vsel %vm128, %v148, %v141
    %v151 = vsel %vm133, %v142, %v147
    %v152 = vsel %vm134, %v141, %v148
    %153 = vrot.lane.b32.xlu0 %v109, 1
    %v154 = vpop.permute.xlu0 %153
    %155 = vrot.lane.b32.xlu0 %v110, 1
    %v156 = vpop.permute.xlu0 %155
    %v157 = vsel %vm115, %v154, %v156
    %v158 = vsel %vm115, %v156, %v154
    %159 = vrot.lane.b32.xlu0 %v109, 127
    %v160 = vpop.permute.xlu0 %159
    %161 = vrot.lane.b32.xlu0 %v110, 127
    %v162 = vpop.permute.xlu0 %161
    %v163 = vsel %vm122, %v160, %v162
    %v164 = vsel %vm122, %v162, %v160
    %v165 = vsel %vm127, %v163, %v158
    %v166 = vsel %vm128, %v164, %v157
    %v167 = vsel %vm133, %v158, %v163
    %v168 = vsel %vm134, %v157, %v164
    %v169 = vld [vmem:[#allocation2] sm:$0xff]
    %v170 = vld [vmem:[%s2] sm:$0xff]
    %172 = vset.pattern.permute.xlu0 0
    %173 = vperm.xlu0 %172, %v170
    %v174 = vpop.permute.xlu0 %173
    %vm176 = vcmask 588800
    %v178 = vsel %vm176, %v169, 0
    %180 = vmatpush.msra.mxu0 0.0
    %181 = vmatpush.msra.mxu0 0.0
    %182 = vmatpush.msra.mxu0 0.0
    %183 = vmatpush.msra.mxu0 0.0
    %184 = vmatpush.msra.mxu0 0.0
    %185 = vmatpush.msra.mxu0 0.0
    %186 = vmatpush.msra.mxu0 0.0
    %187 = vmatpush.msra.mxu0 %v167
    %188 = vmatpush.msra.mxu0 %v109
    %189 = vmatpush.msra.mxu0 %v165
    %190 = vmatpush.msra.mxu0 %v151
    %191 = vmatpush.msra.mxu0 %v49
    %192 = vmatpush.msra.mxu0 %v149
    %193 = vmatpush.msra.mxu0 %v135
    %194 = vmatpush.msra.mxu0 %v103
    %195 = vmatpush.msra.mxu0 %v129
    %196 = vmatmul.f32.gmra.mxu0 %v178
    %v197 = vpop.f32.mrf.mxu0
    %v198 = vadd.f32 %v174, %v197
    %199 = vdwg.mxu0
    %200 = vmatpush.msra.mxu0 0.0
    %201 = vmatpush.msra.mxu0 0.0
    %202 = vmatpush.msra.mxu0 0.0
    %203 = vmatpush.msra.mxu0 0.0
    %204 = vmatpush.msra.mxu0 0.0
    %205 = vmatpush.msra.mxu0 0.0
    %206 = vmatpush.msra.mxu0 0.0
    %207 = vmatpush.msra.mxu0 %v168
    %208 = vmatpush.msra.mxu0 %v110
    %209 = vmatpush.msra.mxu0 %v166
    %210 = vmatpush.msra.mxu0 %v152
    %211 = vmatpush.msra.mxu0 %v50
    %212 = vmatpush.msra.mxu0 %v150
    %213 = vmatpush.msra.mxu0 %v136
    %214 = vmatpush.msra.mxu0 %v104
    %215 = vmatpush.msra.mxu0 %v130
    %216 = vmatmul.f32.gmra.mxu0 %v178
    %v217 = vpop.f32.mrf.mxu0
    %v218 = vadd.f32 %v174, %v217
    %219 = vdwg.mxu0
    %v220 = vadd.f32 %v198, %v218
    %221 = vadd.xlane.f32.xlu0 %v220
    %v222 = vpop.xlane.xlu0 %221
    %v223 = vmul.f32 %v222, 0.00390625
    %v224 = vsub.f32 %v198, %v223
    %v225 = vsub.f32 %v218, %v223
    %v226 = vmul.f32 %v224, %v224
    %v227 = vmul.f32 %v225, %v225
    %v228 = vadd.f32 %v226, %v227
    %229 = vadd.xlane.f32.xlu0 %v228
    %v230 = vpop.xlane.xlu0 %229
    %v231 = vmul.f32 %v230, 0.00390625
    %v232 = vadd.f32 %v231, 1e-05
    %v233 = vrsqrt.pop %v232
    %v234 = vmul.f32 %v233, %v232
    %v235 = vmul.f32 %v234, %v233
    %v236 = vmul.f32 0.5, %v235
    %v237 = vsub.f32 1.5, %v236
    %v238 = vmul.f32 %v233, %v237
    %vm239 = vweird.f32 %v232
    %vm240 = vweird.f32 %v233
    %vm241 = vmor %vm239, %vm240
    %v242 = vsel %vm241, %v233, %v238
    %v243 = vmul.f32 %v224, %v242
    %v244 = vmul.f32 %v225, %v242
    %v245 = vmax.f32 %v243, 0.0
    %v246 = vmax.f32 %v244, 0.0
    %247 = vrot.lane.b32.xlu0 %v245, 16
    %v248 = vpop.permute.xlu0 %247
    %249 = vrot.lane.b32.xlu0 %v246, 16
    %v250 = vpop.permute.xlu0 %249
    %v251 = vsel %vm82, %v248, %v250
    %v252 = vsel %vm82, %v250, %v248
    %253 = vrot.lane.b32.xlu0 %v245, 112
    %v254 = vpop.permute.xlu0 %253
    %255 = vrot.lane.b32.xlu0 %v246, 112
    %v256 = vpop.permute.xlu0 %255
    %v257 = vsel %vm96, %v254, %v256
    %v258 = vsel %vm96, %v256, %v254
    %v259 = vsel %vm101, %v257, %v252
    %v260 = vsel %vm102, %v258, %v251
    %v261 = vsel %vm107, %v252, %v257
    %v262 = vsel %vm108, %v251, %v258
    %263 = vrot.lane.b32.xlu0 %v259, 1
    %v264 = vpop.permute.xlu0 %263
    %265 = vrot.lane.b32.xlu0 %v260, 1
    %v266 = vpop.permute.xlu0 %265
    %v267 = vsel %vm115, %v264, %v266
    %v268 = vsel %vm115, %v266, %v264
    %269 = vrot.lane.b32.xlu0 %v259, 127
    %v270 = vpop.permute.xlu0 %269
    %271 = vrot.lane.b32.xlu0 %v260, 127
    %v272 = vpop.permute.xlu0 %271
    %v273 = vsel %vm122, %v270, %v272
    %v274 = vsel %vm122, %v272, %v270
    %v275 = vsel %vm127, %v273, %v268
    %v276 = vsel %vm128, %v274, %v267
    %v277 = vsel %vm133, %v268, %v273
    %v278 = vsel %vm134, %v267, %v274
    %279 = vrot.lane.b32.xlu0 %v245, 1
    %v280 = vpop.permute.xlu0 %279
    %281 = vrot.lane.b32.xlu0 %v246, 1
    %v282 = vpop.permute.xlu0 %281
    %v283 = vsel %vm115, %v280, %v282
    %v284 = vsel %vm115, %v282, %v280
    %285 = vrot.lane.b32.xlu0 %v245, 127
    %v286 = vpop.permute.xlu0 %285
    %287 = vrot.lane.b32.xlu0 %v246, 127
    %v288 = vpop.permute.xlu0 %287
    %v289 = vsel %vm122, %v286, %v288
    %v290 = vsel %vm122, %v288, %v286
    %v291 = vsel %vm127, %v289, %v284
    %v292 = vsel %vm128, %v290, %v283
    %v293 = vsel %vm133, %v284, %v289
    %v294 = vsel %vm134, %v283, %v290
    %295 = vrot.lane.b32.xlu0 %v261, 1
    %v296 = vpop.permute.xlu0 %295
    %297 = vrot.lane.b32.xlu0 %v262, 1
    %v298 = vpop.permute.xlu0 %297
    %v299 = vsel %vm115, %v296, %v298
    %v300 = vsel %vm115, %v298, %v296
    %301 = vrot.lane.b32.xlu0 %v261, 127
    %v302 = vpop.permute.xlu0 %301
    %303 = vrot.lane.b32.xlu0 %v262, 127
    %v304 = vpop.permute.xlu0 %303
    %v305 = vsel %vm122, %v302, %v304
    %v306 = vsel %vm122, %v304, %v302
    %v307 = vsel %vm127, %v305, %v300
    %v308 = vsel %vm128, %v306, %v299
    %v309 = vsel %vm133, %v300, %v305
    %v310 = vsel %vm134, %v299, %v306
    %v311 = vld [vmem:[#allocation5] sm:$0xff]
    %v312 = vld [vmem:[%s4] sm:$0xff]
    %314 = vset.pattern.permute.xlu0 0
    %315 = vperm.xlu0 %314, %v312
    %v316 = vpop.permute.xlu0 %315
    %v319 = vsel %vm176, %v311, 0
    %321 = vmatpush.msra.mxu0 0.0
    %322 = vmatpush.msra.mxu0 0.0
    %323 = vmatpush.msra.mxu0 0.0
    %324 = vmatpush.msra.mxu0 0.0
    %325 = vmatpush.msra.mxu0 0.0
    %326 = vmatpush.msra.mxu0 0.0
    %327 = vmatpush.msra.mxu0 0.0
    %328 = vmatpush.msra.mxu0 %v309
    %329 = vmatpush.msra.mxu0 %v261
    %330 = vmatpush.msra.mxu0 %v307
    %331 = vmatpush.msra.mxu0 %v293
    %332 = vmatpush.msra.mxu0 %v245
    %333 = vmatpush.msra.mxu0 %v291
    %334 = vmatpush.msra.mxu0 %v277
    %335 = vmatpush.msra.mxu0 %v259
    %336 = vmatpush.msra.mxu0 %v275
    %337 = vmatmul.f32.gmra.mxu0 %v319
    %v338 = vpop.f32.mrf.mxu0
    %v339 = vadd.f32 %v316, %v338
    %340 = vdwg.mxu0
    %341 = vmatpush.msra.mxu0 0.0
    %342 = vmatpush.msra.mxu0 0.0
    %343 = vmatpush.msra.mxu0 0.0
    %344 = vmatpush.msra.mxu0 0.0
    %345 = vmatpush.msra.mxu0 0.0
    %346 = vmatpush.msra.mxu0 0.0
    %347 = vmatpush.msra.mxu0 0.0
    %348 = vmatpush.msra.mxu0 %v310
    %349 = vmatpush.msra.mxu0 %v262
    %350 = vmatpush.msra.mxu0 %v308
    %351 = vmatpush.msra.mxu0 %v294
    %352 = vmatpush.msra.mxu0 %v246
    %353 = vmatpush.msra.mxu0 %v292
    %354 = vmatpush.msra.mxu0 %v278
    %355 = vmatpush.msra.mxu0 %v260
    %356 = vmatpush.msra.mxu0 %v276
    %357 = vmatmul.f32.gmra.mxu0 %v319
    %v358 = vpop.f32.mrf.mxu0
    %v359 = vadd.f32 %v316, %v358
    %360 = vdwg.mxu0
    %v361 = vadd.f32 %v339, %v359
    %362 = vadd.xlane.f32.xlu0 %v361
    %v363 = vpop.xlane.xlu0 %362
    %v364 = vmul.f32 %v363, 0.00390625
    %v365 = vsub.f32 %v339, %v364
    %v366 = vsub.f32 %v359, %v364
    %v367 = vmul.f32 %v365, %v365
    %v368 = vmul.f32 %v366, %v366
    %v369 = vadd.f32 %v367, %v368
    %370 = vadd.xlane.f32.xlu0 %v369
    %v371 = vpop.xlane.xlu0 %370
    %v372 = vmul.f32 %v371, 0.00390625
    %v373 = vadd.f32 %v372, 1e-05
    %v374 = vrsqrt.pop %v373
    %v375 = vmul.f32 %v374, %v373
    %v376 = vmul.f32 %v375, %v374
    %v377 = vmul.f32 0.5, %v376
    %v378 = vsub.f32 1.5, %v377
    %v379 = vmul.f32 %v374, %v378
    %vm380 = vweird.f32 %v373
    %vm381 = vweird.f32 %v374
    %vm382 = vmor %vm380, %vm381
    %v383 = vsel %vm382, %v374, %v379
    %v384 = vmul.f32 %v365, %v383
    %v385 = vmul.f32 %v366, %v383
    %v386 = vadd.f32 %v49, %v384
    %v387 = vadd.f32 %v50, %v385
    %388 = vst [vmem:[#allocation7] sm:$0xff] %v386
    %389 = vst [vmem:[#allocation7 + $0x8] sm:$0xff] %v387
    // Predicated region
    $region30: #{tpu_custom_call.1} parent=1 // pred_check
      _
    $region31: #{tpu_custom_call.1} parent=1 // pred_check_branch
      %391 = sbr.rel (0) target = $region33
    $region32: #{tpu_custom_call.1} parent=1 // pred_region
      %393 = vsyncadd [#allocation4], 0
      %s395 = sshll.u32 [#allocation7], 4
      %s396 = int_to_ptr.vmem [resolvable:$true] %s395
      %s397 = sshll.u32 %s5, 4
      %s398 = int_to_ptr.hbm [resolvable:$true] %s397
      %400 = dma.vmem_to_hbm [thread:$0]  %s396, 256, %s398, [#allocation4]
    $region33: #{tpu_custom_call.1} parent=1 // pred_fallthru
      _
    // Predicated region
    $region34: #{tpu_custom_call.1} parent=1 // pred_check
      _
    $region35: #{tpu_custom_call.1} parent=1 // pred_check_branch
      %402 = sbr.rel (0) target = $region37
    $region36: #{tpu_custom_call.1} parent=1 // pred_region
      %404 = dma.done [#allocation4], 256
    $region37: #{tpu_custom_call.1} parent=1 // pred_fallthru
      _
    %405 = vsyncpa [#allocation3], 1
    %406 = vsyncpa [#allocation6], 1
    %407 = vsyncpa [#allocation4], 1

</llo_original>
